<compile_context>
chip_gen: v7x
topology: tpu7x:2x2x1
jax: 0.10.0
libtpu: 0.0.40
codegen_flags: <defaults>
</compile_context>

<pallas_src>
import functools

import jax
import jax.numpy as jnp
from jax.experimental import pallas as pl
from jax.experimental.pallas import tpu as pltpu

LEAKY_SLOPE = 0.01
BN_EPS = 1e-5


def _leaky_relu(x):
    return jnp.where(x >= 0, x, LEAKY_SLOPE * x)


# ---------------------------------------------------------------------------
# Pass 1: state_fc matmul + per-feature sum / sum-of-squares accumulation.
# No h output -- only the (1, H) stats accumulators leave the kernel.
# ---------------------------------------------------------------------------
def _state_stats_kernel(states_ref, w1_ref, b1_ref, sum_ref, sumsq_ref,
                        *, batch, tile_b):
    i = pl.program_id(0)

    @pl.when(i == 0)
    def _():
        sum_ref[...] = jnp.zeros_like(sum_ref)
        sumsq_ref[...] = jnp.zeros_like(sumsq_ref)

    # bf16 cast happens in-kernel (hidden under the DMA); f32 MXU accumulate.
    h = jnp.dot(states_ref[...].astype(jnp.bfloat16), w1_ref[...],
                preferred_element_type=jnp.float32) + b1_ref[...]

    if batch % tile_b != 0:
        # Last tile is partial: mask rows past the true batch so garbage in
        # the padded region never touches the statistics (select, not mul,
        # so NaN/Inf garbage cannot leak through).
        rows_left = batch - i * tile_b
        row_ids = jax.lax.broadcasted_iota(jnp.int32, h.shape, 0)
        valid = row_ids < rows_left
        h_sum = jnp.where(valid, h, 0.0)
        h_sq = jnp.where(valid, h * h, 0.0)
    else:
        h_sum = h
        h_sq = h * h

    # cross-sublane reduces on the XLU; f32 accumulators stay VMEM-resident
    sum_ref[...] += jnp.sum(h_sum, axis=0, keepdims=True)
    sumsq_ref[...] += jnp.sum(h_sq, axis=0, keepdims=True)


# ---------------------------------------------------------------------------
# Pass 2: recompute h, in-kernel BN fold, leaky, value_fc1, leaky, output_fc.
# ---------------------------------------------------------------------------
def _value_head_kernel(states_ref, action_ref, col_sum_ref, col_sumsq_ref,
                       gamma_ref, beta_ref, w1_ref, b1_ref,
                       w2s_ref, w2a_ref, b2_ref, w3_ref, b3_ref,
                       out_ref, *, inv_b):
    # Fold training-mode BN batch stats into a per-feature scale/shift.
    # (1,128) math; rsqrt goes to the otherwise-idle EUP slot.
    # NOTE: E[x^2] - mean^2 (clamped >= 0) is a one-pass variance; can lose
    # precision vs the two-pass form for badly-scaled pre-BN activations.
    mean = col_sum_ref[...] * inv_b
    var = jnp.maximum(col_sumsq_ref[...] * inv_b - mean * mean, 0.0)
    scale = gamma_ref[...] * jax.lax.rsqrt(var + BN_EPS)
    shift = beta_ref[...] - mean * scale

    # Recompute h = states @ W1 + b1 (bit-identical to pass 1) instead of
    # round-tripping the (B,128) f32 intermediate through HBM.
    h = jnp.dot(states_ref[...].astype(jnp.bfloat16), w1_ref[...],
                preferred_element_type=jnp.float32) + b1_ref[...]

    # BatchNorm as a single per-feature FMA (f32 VPU math) + leaky.
    xs = _leaky_relu(h * scale + shift)

    # value_fc1, state half: one K=128 bf16 MXU pass, f32 accumulate.
    z = jnp.dot(xs.astype(jnp.bfloat16), w2s_ref[...],
                preferred_element_type=jnp.float32) + b2_ref[...]

    # value_fc1, action half: K=action_size (tiny) expanded as unrolled
    # broadcast FMAs on the VPU -- avoids a wasted full MXU pass for K=4.
    act = action_ref[...]
    w2a = w2a_ref[...]
    for j in range(act.shape[1]):          # static, unrolled at trace time
        z = z + act[:, j:j + 1] * w2a[j:j + 1, :]

    x = _leaky_relu(z)

    # output_fc (128 -> 1): VPU broadcast-multiply + XLU lane reduce instead
    # of an N=1 MXU matmul; b3 is a scalar read from SMEM.
    out_ref[...] = (jnp.sum(x * w3_ref[...], axis=-1, keepdims=True)
                    + b3_ref[0, 0])


# ---------------------------------------------------------------------------
# Wrapper
# ---------------------------------------------------------------------------
def _pick_batch_tile(batch, state_size, max_tile=2048,
                     vmem_tile_budget=2 << 20):
    """Batch tile size.

    Large tiles (up to 2048 rows) amortize the ~0.35 us per-grid-step
    overhead; the cap is only a VMEM-budget guard (double-buffered states
    tile must stay well inside the smallest scoped-VMEM default, v5e's
    16 MiB) -- it is NOT a v7x requirement.  For batches larger than the
    cap we use grid = cdiv(B, tile_b) with a masked/dropped partial last
    tile, so no degenerate tiny-tile fallback exists.
    """
    cap = min(max_tile, max(256, vmem_tile_budget // (4 * max(state_size, 1))))
    cap = max(8, (cap // 8) * 8)
    if batch <= cap:
        return batch
    return cap


def critic_batchn_forward(states, action, params, *, max_tile_b=2048):
    B, S = states.shape
    A = action.shape[1]
    H = params["w2s"].shape[1]

    tile_b = _pick_batch_tile(B, S, max_tile_b)
    nt = pl.cdiv(B, tile_b)

    # one-time tiny bf16 casts of the weight MXU operands (f32 accumulation
    # in-kernel); the large `states` tensor is cast inside the kernels.
    w1_bf = params["w1"].astype(jnp.bfloat16)
    w2s_bf = params["w2s"].astype(jnp.bfloat16)

    # ---- pass 1: per-feature column sum / sum-of-squares of h ------------
    col_sum, col_sumsq = pl.pallas_call(
        functools.partial(_state_stats_kernel, batch=B, tile_b=tile_b),
        grid=(nt,),
        in_specs=[
            pl.BlockSpec((tile_b, S), lambda i: (i, 0)),   # states (f32)
            pl.BlockSpec((S, H), lambda i: (0, 0)),        # W1     (bf16)
            pl.BlockSpec((1, H), lambda i: (0, 0)),        # b1     (f32)
        ],
        out_specs=(
            pl.BlockSpec((1, H), lambda i: (0, 0)),        # sum   (accum)
            pl.BlockSpec((1, H), lambda i: (0, 0)),        # sumsq (accum)
        ),
        out_shape=(
            jax.ShapeDtypeStruct((1, H), jnp.float32),
            jax.ShapeDtypeStruct((1, H), jnp.float32),
        ),
        compiler_params=pltpu.CompilerParams(
            dimension_semantics=("arbitrary",)),
    )(states, w1_bf, params["b1"])

    w3_row = params["w3"].reshape(1, H)   # (1, 128) for the lane reduce
    b3 = params["b3"].reshape(1, 1)       # scalar, lives in SMEM

    # ---- pass 2: recompute h, fold BN in-kernel, value head --------------
    out = pl.pallas_call(
        functools.partial(_value_head_kernel, inv_b=1.0 / B),
        grid=(nt,),
        in_specs=[
            pl.BlockSpec((tile_b, S), lambda i: (i, 0)),   # states (f32)
            pl.BlockSpec((tile_b, A), lambda i: (i, 0)),   # action (f32)
            pl.BlockSpec((1, H), lambda i: (0, 0)),        # col_sum
            pl.BlockSpec((1, H), lambda i: (0, 0)),        # col_sumsq
            pl.BlockSpec((1, H), lambda i: (0, 0)),        # gamma
            pl.BlockSpec((1, H), lambda i: (0, 0)),        # beta
            pl.BlockSpec((S, H), lambda i: (0, 0)),        # W1  (bf16)
            pl.BlockSpec((1, H), lambda i: (0, 0)),        # b1
            pl.BlockSpec((H, H), lambda i: (0, 0)),        # W2s (bf16)
            pl.BlockSpec((A, H), lambda i: (0, 0)),        # W2a (f32, VPU)
            pl.BlockSpec((1, H), lambda i: (0, 0)),        # b2
            pl.BlockSpec((1, H), lambda i: (0, 0)),        # w3 row
            pl.BlockSpec(memory_space=pltpu.MemorySpace.SMEM),  # b3 scalar
        ],
        out_specs=pl.BlockSpec((tile_b, 1), lambda i: (i, 0)),
        out_shape=jax.ShapeDtypeStruct((B, 1), jnp.float32),
        compiler_params=pltpu.CompilerParams(
            dimension_semantics=("parallel",)),
    )(states, action, col_sum, col_sumsq, params["gamma"], params["beta"],
      w1_bf, params["b1"], w2s_bf, params["w2a"], params["b2"], w3_row, b3)

    return out


# ---------------------------------------------------------------------------
# Parameter init mirroring Critic_batchn.__init__/reset_parameters
# ---------------------------------------------------------------------------
def init_params(key, state_size, action_size, hidden=128):
    ks = jax.random.split(key, 6)

    # hidden_init uses weight.size()[0] == out_features
    lim1 = 1.0 / jnp.sqrt(jnp.float32(hidden))   # state_fc
    lim2 = 1.0 / jnp.sqrt(jnp.float32(hidden))   # value_fc1
    # default PyTorch Linear bias init: U(-1/sqrt(fan_in), 1/sqrt(fan_in))
    blim1 = 1.0 / jnp.sqrt(jnp.float32(state_size))
    blim2 = 1.0 / jnp.sqrt(jnp.float32(hidden + action_size))
    blim3 = 1.0 / jnp.sqrt(jnp.float32(hidden))

    # Weights stored as [in, out] (transposed vs. PyTorch's [out, in]).
    w1 = jax.random.uniform(ks[0], (state_size, hidden), jnp.float32,
                            -lim1, lim1)
    b1 = jax.random.uniform(ks[1], (1, hidden), jnp.float32, -blim1, blim1)

    w2 = jax.random.uniform(ks[2], (hidden + action_size, hidden),
                            jnp.float32, -lim2, lim2)
    b2 = jax.random.uniform(ks[3], (1, hidden), jnp.float32, -blim2, blim2)

    w3 = jax.random.uniform(ks[4], (hidden, 1), jnp.float32, -0.003, 0.003)
    b3 = jax.random.uniform(ks[5], (1, 1), jnp.float32, -blim3, blim3)

    gamma = jnp.ones((1, hidden), jnp.float32)   # BatchNorm1d weight
    beta = jnp.zeros((1, hidden), jnp.float32)   # BatchNorm1d bias

    return {
        "w1": w1, "b1": b1,
        "gamma": gamma, "beta": beta,
        "w2s": w2[:hidden, :], "w2a": w2[hidden:, :], "b2": b2,
        "w3": w3, "b3": b3,
    }


# ---------------------------------------------------------------------------
# References
# ---------------------------------------------------------------------------
def reference_forward_f32(states, action, p):
    """Faithful f32 forward (module semantics, training-mode BN)."""
    h = states @ p["w1"] + p["b1"]
    mean = jnp.mean(h, axis=0, keepdims=True)
    var = jnp.mean((h - mean) ** 2, axis=0, keepdims=True)
    hbn = (h - mean) / jnp.sqrt(var + BN_EPS) * p["gamma"] + p["beta"]
    xs = jnp.where(hbn >= 0, hbn, LEAKY_SLOPE * hbn)
    z = xs @ p["w2s"] + action @ p["w2a"] + p["b2"]
    x = jnp.where(z >= 0, z, LEAKY_SLOPE * z)
    return x @ p["w3"] + p["b3"]


def reference_forward_matched(states, action, p):
    """Same math as the kernel (bf16 MXU inputs, E[x^2]-mean^2 variance)."""
    B = states.shape[0]
    inv_b = 1.0 / B
    h = jnp.dot(states.astype(jnp.bfloat16), p["w1"].astype(jnp.bfloat16),
                preferred_element_type=jnp.float32) + p["b1"]
    mean = jnp.sum(h, axis=0, keepdims=True) * inv_b
    var = jnp.maximum(jnp.sum(h * h, axis=0, keepdims=True) * inv_b
                      - mean * mean, 0.0)
    scale = p["gamma"] * jax.lax.rsqrt(var + BN_EPS)
    shift = p["beta"] - mean * scale
    xs = _leaky_relu(h * scale + shift)
    z = jnp.dot(xs.astype(jnp.bfloat16), p["w2s"].astype(jnp.bfloat16),
                preferred_element_type=jnp.float32) + p["b2"]
    z = z + action @ p["w2a"]
    x = _leaky_relu(z)
    return (jnp.sum(x * p["w3"].reshape(1, -1), axis=-1, keepdims=True)
            + p["b3"].reshape(1, 1))


if __name__ == "__main__":
    B, STATE, ACTION = 8, 32, 4

    key = jax.random.PRNGKey(0)
    k_states, k_action, k_params = jax.random.split(key, 3)

    states = jax.random.normal(k_states, (B, STATE), jnp.float32)
    action = jax.random.normal(k_action, (B, ACTION), jnp.float32)
    params = init_params(k_params, STATE, ACTION)

    out = critic_batchn_forward(states, action, params)
    out = jax.block_until_ready(out)

    assert out.shape == (B, 1), out.shape

    # Tight check against the precision-matched reference (same bf16 casts).
    ref_m = reference_forward_matched(states, action, params)
    assert jnp.allclose(out, ref_m, atol=1e-3, rtol=1e-3), \
        "mismatch vs precision-matched reference"

    # Looser semantic check against the full-f32 module reference
    # (difference is only bf16 MXU-input rounding).
    ref_f = reference_forward_f32(states, action, params)
    assert jnp.allclose(out, ref_f, atol=1e-2, rtol=1e-2), \
        "mismatch vs f32 reference"

    print("KERNEL_OK")
</pallas_src>

<mosaic_0001>
module attributes {stable_mosaic.version = 11 : i64} {
  func.func @_state_stats_kernel(%arg0: i32, %arg1: memref<8x32xf32, #tpu.memory_space<vmem>>, %arg2: memref<32x128xbf16, #tpu.memory_space<vmem>>, %arg3: memref<1x128xf32, #tpu.memory_space<vmem>>, %arg4: memref<1x128xf32, #tpu.memory_space<vmem>>, %arg5: memref<1x128xf32, #tpu.memory_space<vmem>>) attributes {dimension_semantics = [#tpu.dimension_semantics<arbitrary>], iteration_bounds = array<i64: 1>, scalar_prefetch = 0 : i64, scratch_operands = 0 : i64, tpu.core_type = #tpu.core_type<tc>, window_params = [{transform_indices = @transform_0, window_bounds = array<i64: 8, 32>}, {pipeline_mode = #tpu.pipeline_mode<synchronous>, transform_indices = @transform_1, window_bounds = array<i64: 32, 128>}, {pipeline_mode = #tpu.pipeline_mode<synchronous>, transform_indices = @transform_2, window_bounds = array<i64: 1, 128>}, {pipeline_mode = #tpu.pipeline_mode<synchronous>, transform_indices = @transform_3, window_bounds = array<i64: 1, 128>}, {pipeline_mode = #tpu.pipeline_mode<synchronous>, transform_indices = @transform_4, window_bounds = array<i64: 1, 128>}]} {
    %c0_i32 = arith.constant 0 : i32
    %0 = arith.cmpi eq, %arg0, %c0_i32 : i32
    %1 = arith.extui %0 : i1 to i32
    %c0_i32_0 = arith.constant 0 : i32
    %2 = arith.cmpi ne, %1, %c0_i32_0 : i32
    scf.if %2 {
      %cst_16 = arith.constant 0.000000e+00 : f32
      %21 = vector.broadcast %cst_16 : f32 to vector<1x128xf32>
      %c0_17 = arith.constant 0 : index
      %c0_18 = arith.constant 0 : index
      %22 = vector.load %arg4[%c0_17, %c0_18] : memref<1x128xf32, #tpu.memory_space<vmem>>, vector<1x128xf32>
      tpu.vector_store %arg4[%c0_17, %c0_18], %21 {strides = array<i32>} : memref<1x128xf32, #tpu.memory_space<vmem>>, vector<1x128xf32>,
      %cst_19 = arith.constant 0.000000e+00 : f32
      %23 = vector.broadcast %cst_19 : f32 to vector<1x128xf32>
      %c0_20 = arith.constant 0 : index
      %c0_21 = arith.constant 0 : index
      %24 = vector.load %arg5[%c0_20, %c0_21] : memref<1x128xf32, #tpu.memory_space<vmem>>, vector<1x128xf32>
      tpu.vector_store %arg5[%c0_20, %c0_21], %23 {strides = array<i32>} : memref<1x128xf32, #tpu.memory_space<vmem>>, vector<1x128xf32>,
    } else {
    }
    %c0 = arith.constant 0 : index
    %c0_1 = arith.constant 0 : index
    %3 = vector.load %arg1[%c0, %c0_1] : memref<8x32xf32, #tpu.memory_space<vmem>>, vector<8x32xf32>
    %4 = arith.truncf %3 : vector<8x32xf32> to vector<8x32xbf16>
    %c0_2 = arith.constant 0 : index
    %c0_3 = arith.constant 0 : index
    %5 = vector.load %arg2[%c0_2, %c0_3] : memref<32x128xbf16, #tpu.memory_space<vmem>>, vector<32x128xbf16>
    %cst = arith.constant dense<0.000000e+00> : vector<8x128xf32>
    %6 = tpu.matmul %4, %5, %cst {dimension_numbers = #tpu.dot_dimension_numbers<[1], [0], [0], [1], [0, 0, 1, 1], [], []>} : vector<8x32xbf16>, vector<32x128xbf16>, vector<8x128xf32> -> vector<8x128xf32>
    %c0_4 = arith.constant 0 : index
    %c0_5 = arith.constant 0 : index
    %7 = vector.load %arg3[%c0_4, %c0_5] : memref<1x128xf32, #tpu.memory_space<vmem>>, vector<1x128xf32>
    %8 = vector.broadcast %7 : vector<1x128xf32> to vector<8x128xf32>
    %9 = arith.addf %6, %8 : vector<8x128xf32>
    %10 = arith.mulf %9, %9 : vector<8x128xf32>
    %c0_6 = arith.constant 0 : index
    %c0_7 = arith.constant 0 : index
    %11 = vector.load %arg4[%c0_6, %c0_7] : memref<1x128xf32, #tpu.memory_space<vmem>>, vector<1x128xf32>
    %cst_8 = arith.constant dense<0.000000e+00> : vector<128xf32>
    %12 = vector.multi_reduction <add>, %9, %cst_8 [0] : vector<8x128xf32> to vector<128xf32>
    %13 = vector.shape_cast %12 : vector<128xf32> to vector<1x128xf32>
    %14 = arith.addf %11, %13 : vector<1x128xf32>
    %c0_9 = arith.constant 0 : index
    %c0_10 = arith.constant 0 : index
    %15 = vector.load %arg4[%c0_9, %c0_10] : memref<1x128xf32, #tpu.memory_space<vmem>>, vector<1x128xf32>
    tpu.vector_store %arg4[%c0_9, %c0_10], %14 {strides = array<i32>} : memref<1x128xf32, #tpu.memory_space<vmem>>, vector<1x128xf32>,
    %c0_11 = arith.constant 0 : index
    %c0_12 = arith.constant 0 : index
    %16 = vector.load %arg5[%c0_11, %c0_12] : memref<1x128xf32, #tpu.memory_space<vmem>>, vector<1x128xf32>
    %cst_13 = arith.constant dense<0.000000e+00> : vector<128xf32>
    %17 = vector.multi_reduction <add>, %10, %cst_13 [0] : vector<8x128xf32> to vector<128xf32>
    %18 = vector.shape_cast %17 : vector<128xf32> to vector<1x128xf32>
    %19 = arith.addf %16, %18 : vector<1x128xf32>
    %c0_14 = arith.constant 0 : index
    %c0_15 = arith.constant 0 : index
    %20 = vector.load %arg5[%c0_14, %c0_15] : memref<1x128xf32, #tpu.memory_space<vmem>>, vector<1x128xf32>
    tpu.vector_store %arg5[%c0_14, %c0_15], %19 {strides = array<i32>} : memref<1x128xf32, #tpu.memory_space<vmem>>, vector<1x128xf32>,
    return
  }
  func.func @transform_0(%arg0: i32) -> (i32, i32) {
    %c0_i32 = arith.constant 0 : i32
    %c0_i32_0 = arith.constant 0 : i32
    return %arg0, %c0_i32 : i32, i32
  }
  func.func @transform_1(%arg0: i32) -> (i32, i32) {
    %c0_i32 = arith.constant 0 : i32
    %c0_i32_0 = arith.constant 0 : i32
    %c0_i32_1 = arith.constant 0 : i32
    return %c0_i32, %c0_i32_0 : i32, i32
  }
  func.func @transform_2(%arg0: i32) -> (i32, i32) {
    %c0_i32 = arith.constant 0 : i32
    %c0_i32_0 = arith.constant 0 : i32
    %c0_i32_1 = arith.constant 0 : i32
    return %c0_i32, %c0_i32_0 : i32, i32
  }
  func.func @transform_3(%arg0: i32) -> (i32, i32) {
    %c0_i32 = arith.constant 0 : i32
    %c0_i32_0 = arith.constant 0 : i32
    %c0_i32_1 = arith.constant 0 : i32
    return %c0_i32, %c0_i32_0 : i32, i32
  }
  func.func @transform_4(%arg0: i32) -> (i32, i32) {
    %c0_i32 = arith.constant 0 : i32
    %c0_i32_0 = arith.constant 0 : i32
    %c0_i32_1 = arith.constant 0 : i32
    return %c0_i32, %c0_i32_0 : i32, i32
  }
}

</mosaic_0001>

<llo_original>
// kernel: tpu_custom_call.1
$region0: #{tpu_custom_call.1}
  #allocation0 [shape = 'u32[]', space=smem, size = 0x4, offset = 0x4, fixed_abs, tag = 'smem constant byte address 0x4 - core index']
  #allocation1 [shape = 'u32[144,128]{1,0:T(1,128)}', space=vmem, size = 0x12000, scoped, tag = 'internal scratch']
  %s0 = inlined_call_operand.hbm [shape: f32[8,32], index: 0, kind: input, shape index: {}]
  %s1 = inlined_call_operand.hbm [shape: bf16[32,128], index: 1, kind: input, shape index: {}]
  %s2 = inlined_call_operand.vmem [shape: f32[1,128], index: 2, kind: input, shape index: {}]
  %s3 = inlined_call_operand.hbm [shape: f32[1,128], index: 3, kind: output, shape index: {0}]
  %s4 = inlined_call_operand.hbm [shape: f32[1,128], index: 4, kind: output, shape index: {1}]
  %5 = xla_tuple %s3, %s4
  %s6 = sld [smem:[#allocation0]]
  $region42: #{tpu_custom_call.1} parent=0
    _
  %s8 = ssub.s32 1, %s6
  %s9 = scalar_select 0, %s8, %s6
  $region1: #{tpu_custom_call.1} parent=0
    #allocation2 [shape = 'u8[4096]{0}', space=vmem, size = 0x1000, scoped, tag = 'input window, operand 0, single buffered']
    #allocation3 [shape = 's32[1]{0}', space=sflag, size = 0x4, scoped, tag = 'scoped memory for tpu_custom_call.1']
    #allocation4 [shape = 's32[1]{0}', space=sflag, size = 0x4, scoped, tag = 'scoped memory for tpu_custom_call.1']
    #allocation5 [shape = 'u8[8192]{0}', space=vmem, size = 0x2000, scoped, tag = 'input window, operand 1, single buffered']
    #allocation6 [shape = 's32[1]{0}', space=sflag, size = 0x4, scoped, tag = 'scoped memory for tpu_custom_call.1']
    #allocation7 [shape = 'u8[512]{0}', space=vmem, size = 0x400, scoped, tag = 'output window, operand 0, single buffered']
    #allocation8 [shape = 'u8[512]{0}', space=vmem, size = 0x400, scoped, tag = 'output window, operand 1, single buffered']
    #allocation9 [shape = 's32[1]{0}', space=sflag, size = 0x4, scoped, tag = 'scoped memory for tpu_custom_call.1']
    %10 = vsyncpa [#allocation3], 0
    %11 = vsyncpa [#allocation6], 0
    %12 = vsyncpa [#allocation4], 0
    %13 = vsyncpa [#allocation9], 0
    // Predicated region
    $region2: #{tpu_custom_call.1} parent=1 // pred_check
      _
    $region3: #{tpu_custom_call.1} parent=1 // pred_check_branch
      %15 = sbr.rel (0) target = $region5
    $region4: #{tpu_custom_call.1} parent=1 // pred_region
      %s17 = ssub.s32 128, 128
      %18 = vsyncadd [#allocation3], %s17
      %s20 = sshll.u32 [#allocation2], 4
      %s21 = int_to_ptr.vmem [resolvable:$true] %s20
      %23 = dma.hbm_to_vmem [thread:$0]  %s0, 128, %s21, [#allocation3]
    $region5: #{tpu_custom_call.1} parent=1 // pred_fallthru
      _
    // Predicated region
    $region6: #{tpu_custom_call.1} parent=1 // pred_check
      _
    $region7: #{tpu_custom_call.1} parent=1 // pred_check_branch
      %25 = sbr.rel (0) target = $region9
    $region8: #{tpu_custom_call.1} parent=1 // pred_region
      %s27 = ssub.s32 256, 256
      %28 = vsyncadd [#allocation6], %s27
      %s29 = sshll.u32 [#allocation5], 4
      %s30 = int_to_ptr.vmem [resolvable:$true] %s29
      %35 = dma.hbm_to_vmem [thread:$0]  %s1, 256, %s30, [#allocation6], 64, 64, 4
    $region9: #{tpu_custom_call.1} parent=1 // pred_fallthru
      _
    // Predicated region
    $region10: #{tpu_custom_call.1} parent=1 // pred_check
      _
    $region11: #{tpu_custom_call.1} parent=1 // pred_check_branch
      %37 = sbr.rel (0) target = $region13
    $region12: #{tpu_custom_call.1} parent=1 // pred_region
      _
    $region13: #{tpu_custom_call.1} parent=1 // pred_fallthru
      _
    // Predicated region
    $region14: #{tpu_custom_call.1} parent=1 // pred_check
      _
    $region15: #{tpu_custom_call.1} parent=1 // pred_check_branch
      %39 = sbr.rel (0) target = $region17
    $region16: #{tpu_custom_call.1} parent=1 // pred_region
      %40 = dma.done [#allocation3], 128
    $region17: #{tpu_custom_call.1} parent=1 // pred_fallthru
      _
    // Predicated region
    $region18: #{tpu_custom_call.1} parent=1 // pred_check
      _
    $region19: #{tpu_custom_call.1} parent=1 // pred_check_branch
      %42 = sbr.rel (0) target = $region21
    $region20: #{tpu_custom_call.1} parent=1 // pred_region
      %43 = dma.done [#allocation6], 256
    $region21: #{tpu_custom_call.1} parent=1 // pred_fallthru
      _
    %p45 = scmp.eq.s32.totalorder 0, 0
    // Predicated region
    $region22: #{tpu_custom_call.1} parent=1 // pred_check
      %p46 = pneg %p45
    $region23: #{tpu_custom_call.1} parent=1 // pred_check_branch
      %48 = sbr.rel (%p46) target = $region25
    $region24: #{tpu_custom_call.1} parent=1 // pred_region
      %49 = vst [vmem:[#allocation7] sm:$0x1] 0.0
      %50 = vst [vmem:[#allocation8] sm:$0x1] 0.0
    $region25: #{tpu_custom_call.1} parent=1 // pred_fallthru
      _
    %v51 = vld [vmem:[#allocation2] sm:$0xff]
    %v52 = vpack.c.bf16 %v51, %v51
    %v53 = vld [vmem:[#allocation5] sm:$0xf]
    %v54 = vld [vmem:[#allocation5 + $0x4] sm:$0xf]
    %v55 = vld [vmem:[#allocation5 + $0x8] sm:$0xf]
    %v56 = vld [vmem:[#allocation5 + $0xc] sm:$0xf]
    %v57 = vld [vmem:[%s2] sm:$0x1]
    %v59 = vlaneseq
    %v60 = vshrl.u32 %v59, 7
    %v61 = vsub.s32 0, %v60
    %v62 = vrot.slane %v57, %v61
    %v68 = vunpack.c.l.b16 %v53
    %v69 = vunpack.c.l.b16 %v54
    %v70 = vunpack.c.l.b16 %v55
    %v71 = vunpack.c.l.b16 %v56
    %v72 = vpack.c.b16 %v69, %v68
    %v73 = vpack.c.b16 %v71, %v70
    %vm76 = vcmask 261120
    %v78 = vsel %vm76, %v52, 0
    %80 = vmatprep.subr.bf16.mxu0 0
    %81 = vmatpush1.bf16.msra.mxu0 %v72
    %82 = vmatprep.subr.bf16.mxu0 0
    %83 = vmatpush1.bf16.msra.mxu0 %v73
    %84 = vmatprep.subr.bf16.mxu0 0
    %85 = vmatpush1.bf16.msra.mxu0 0
    %86 = vmatprep.subr.bf16.mxu0 0
    %87 = vmatpush1.bf16.msra.mxu0 0
    %88 = vmatprep.subr.bf16.mxu0 0
    %89 = vmatpush1.bf16.msra.mxu0 0
    %90 = vmatprep.subr.bf16.mxu0 0
    %91 = vmatpush1.bf16.msra.mxu0 0
    %92 = vmatprep.subr.bf16.mxu0 0
    %93 = vmatpush1.bf16.msra.mxu0 0
    %94 = vmatprep.subr.bf16.mxu0 0
    %95 = vmatpush1.bf16.msra.mxu0 0
    %96 = vmatprep.subr.bf16.mxu0 0
    %97 = vmatpush1.bf16.msra.mxu0 0
    %98 = vmatprep.subr.bf16.mxu0 0
    %99 = vmatpush1.bf16.msra.mxu0 0
    %100 = vmatprep.subr.bf16.mxu0 0
    %101 = vmatpush1.bf16.msra.mxu0 0
    %102 = vmatprep.subr.bf16.mxu0 0
    %103 = vmatpush1.bf16.msra.mxu0 0
    %104 = vmatprep.subr.bf16.mxu0 0
    %105 = vmatpush1.bf16.msra.mxu0 0
    %106 = vmatprep.subr.bf16.mxu0 0
    %107 = vmatpush1.bf16.msra.mxu0 0
    %108 = vmatprep.subr.bf16.mxu0 0
    %109 = vmatpush1.bf16.msra.mxu0 0
    %110 = vmatprep.subr.bf16.mxu0 0
    %111 = vmatpush1.bf16.msra.mxu0 0
    %112 = vmatprep.mubr.bf16.mxu0 0
    %113 = vmatmul.mubr.bf16.gmra.mrb[0].mxu0 %v78
    %v114 = vpop.f32.mrb[0].mxu0
    %v115 = vadd.f32 %v62, %v114
    %v116 = vpop.f32.mrb[0].mxu0
    %v117 = vpop.f32.mrb[0].mxu0
    %v118 = vpop.f32.mrb[0].mxu0
    %119 = vdwg.mxu0
    %v120 = vmul.f32 %v115, %v115
    %v121 = vld [vmem:[#allocation7] sm:$0x1]
    %v122 = vrot.slane %v115, 4
    %v123 = vadd.f32 %v115, %v122
    %v124 = vrot.slane %v123, 2
    %v125 = vadd.f32 %v123, %v124
    %v126 = vrot.slane %v125, 1
    %v127 = vadd.f32 %v125, %v126
    %v128 = vadd.f32 %v121, %v127
    %129 = vst [vmem:[#allocation7] sm:$0x1] %v128
    %v130 = vld [vmem:[#allocation8] sm:$0x1]
    %v131 = vrot.slane %v120, 4
    %v132 = vadd.f32 %v120, %v131
    %v133 = vrot.slane %v132, 2
    %v134 = vadd.f32 %v132, %v133
    %v135 = vrot.slane %v134, 1
    %v136 = vadd.f32 %v134, %v135
    %v137 = vadd.f32 %v130, %v136
    %138 = vst [vmem:[#allocation8] sm:$0x1] %v137
    // Predicated region
    $region26: #{tpu_custom_call.1} parent=1 // pred_check
      _
    $region27: #{tpu_custom_call.1} parent=1 // pred_check_branch
      %140 = sbr.rel (0) target = $region29
    $region28: #{tpu_custom_call.1} parent=1 // pred_region
      %s142 = ssub.s32 16, 16
      %143 = vsyncadd [#allocation4], %s142
      %s145 = sshll.u32 [#allocation7], 4
      %s146 = int_to_ptr.vmem [resolvable:$true] %s145
      %148 = dma.vmem_to_hbm [thread:$0]  %s146, 16, %s3, [#allocation4]
    $region29: #{tpu_custom_call.1} parent=1 // pred_fallthru
      _
    // Predicated region
    $region30: #{tpu_custom_call.1} parent=1 // pred_check
      _
    $region31: #{tpu_custom_call.1} parent=1 // pred_check_branch
      %150 = sbr.rel (0) target = $region33
    $region32: #{tpu_custom_call.1} parent=1 // pred_region
      %s152 = ssub.s32 16, 16
      %153 = vsyncadd [#allocation9], %s152
      %s155 = sshll.u32 [#allocation8], 4
      %s156 = int_to_ptr.vmem [resolvable:$true] %s155
      %158 = dma.vmem_to_hbm [thread:$0]  %s156, 16, %s4, [#allocation9]
    $region33: #{tpu_custom_call.1} parent=1 // pred_fallthru
      _
    // Predicated region
    $region34: #{tpu_custom_call.1} parent=1 // pred_check
      _
    $region35: #{tpu_custom_call.1} parent=1 // pred_check_branch
      %160 = sbr.rel (0) target = $region37
    $region36: #{tpu_custom_call.1} parent=1 // pred_region
      %161 = dma.done [#allocation4], 16
    $region37: #{tpu_custom_call.1} parent=1 // pred_fallthru
      _
    // Predicated region
    $region38: #{tpu_custom_call.1} parent=1 // pred_check
      _
    $region39: #{tpu_custom_call.1} parent=1 // pred_check_branch
      %163 = sbr.rel (0) target = $region41
    $region40: #{tpu_custom_call.1} parent=1 // pred_region
      %164 = dma.done [#allocation9], 16
    $region41: #{tpu_custom_call.1} parent=1 // pred_fallthru
      _
    %165 = vsyncpa [#allocation3], 1
    %166 = vsyncpa [#allocation6], 1
    %167 = vsyncpa [#allocation4], 1
    %168 = vsyncpa [#allocation9], 1

</llo_original>
